<compile_context>
chip_gen: v5e
topology: v5e:2x2
jax: 0.10.0
libtpu: 0.0.40
codegen_flags: <defaults>
</compile_context>

<pallas_src>
import functools

import jax
import jax.numpy as jnp
from jax.experimental import pallas as pl
from jax.experimental.pallas import tpu as pltpu


def _round_up(x, m):
    return ((x + m - 1) // m) * m


def _vmem_capacity_bytes():
    try:
        return pltpu.get_tpu_info().vmem_capacity_bytes
    except Exception:
        return 64 << 20                      # conservative (v7x-sized) fallback


# --------------------------------------------------------------------------
# Kernel bodies
# --------------------------------------------------------------------------
def _contract_over_d(x_ref, w_ref, d_chunk):
    """att[s, b] = sum_d x[s, b, d] * w[0, d]  (Linear(D->1), squeeze(-1)).

    VPU reduce, chunked over the lane axis (128-aligned chunks) so only one
    bounded (S, Bt, dc) f32 temporary is live per chunk; bf16 x is cast to
    f32 before the multiply."""
    S, Bt, D = x_ref.shape
    dc = min(D, d_chunk)
    att = jnp.zeros((S, Bt), dtype=jnp.float32)
    for c in range(pl.cdiv(D, dc)):          # trace-time, lane-aligned chunks
        lo = c * dc
        hi = min(D, lo + dc)
        w_c = w_ref[:, lo:hi][0][None, None, :]            # (1, 1, hi-lo) f32
        x_c = x_ref[:, :, lo:hi].astype(jnp.float32)       # bf16 -> f32
        att = att + jnp.sum(x_c * w_c, axis=-1)
    return att


def _masked_softmax(att, len_row):
    """Faithful to torch _masked_softmax: exp (no max subtraction), zero where
    s >= len_s[b], sum over seq, +1e-4."""
    S, Bt = att.shape
    idx = jax.lax.broadcasted_iota(jnp.int32, (S, Bt), 0)
    mask = idx < len_row                     # (1, Bt) int32 broadcasts
    e = jnp.where(mask, jnp.exp(att), 0.0)   # == exp(att)*mask, NaN-safe
    denom = jnp.sum(e, axis=0, keepdims=True) + 0.0001     # (1, Bt)
    return e * pl.reciprocal(denom, approx=False)


def _embed_attention_kernel(x_ref, w_ref, len_ref, o_ref, *, d_chunk):
    att = _contract_over_d(x_ref, w_ref, d_chunk)
    o_ref[...] = _masked_softmax(att, len_ref[...])


def _att_pass_kernel(x_ref, w_ref, att_ref, *, d_chunk):
    att_ref[...] = _contract_over_d(x_ref, w_ref, d_chunk)


def _softmax_pass_kernel(att_ref, len_ref, o_ref):
    o_ref[...] = _masked_softmax(att_ref[...], len_ref[...])


# --------------------------------------------------------------------------
# Tiling / VMEM budgeting
# --------------------------------------------------------------------------
def _working_set_bytes(S, D, itemsize, btile, d_chunk):
    dc = min(D, d_chunk)
    in_tile = S * btile * D * itemsize       # one input buffer
    f32_chunk = S * btile * dc * 4           # x-chunk cast + product temporaries
    plane = S * btile * 4                    # one (S, btile) f32 plane
    # 2x input (double buffer) + ~3x chunk temps + ~6 planes (att/e/out x2) + slack
    return 2 * in_tile + 3 * f32_chunk + 6 * plane + (1 << 20)


def _pick_btile(S, B, D, itemsize, d_chunk, budget):
    """Largest lane-dense batch tile whose working set fits `budget`; keeps
    >= 2 grid steps whenever the (padded) batch allows it."""
    b_cap = max(128, _round_up(B, 128))
    for bt in (512, 256, 128):
        if bt <= b_cap and _working_set_bytes(S, D, itemsize, bt, d_chunk) <= budget:
            while bt > 128 and pl.cdiv(b_cap, bt) < 2:
                bt //= 2                     # >= 2 steps: pipelining + v7x 2 TCs
            return bt
    if _working_set_bytes(S, D, itemsize, 64, d_chunk) <= budget:
        return 64                            # half-lane tile only if VMEM forces it
    return None                              # S*D too large -> two-pass path


# --------------------------------------------------------------------------
# Wrappers
# --------------------------------------------------------------------------
def embed_attention(x, w, len_s, *, btile=None, d_chunk=128, force_two_pass=False):
    """x: (S, B, D) float32/bfloat16; w: (1, D); len_s: (B,) lengths.
    Returns (S, B, 1) f32 masked-softmax attention weights over the seq axis."""
    S, B, D = x.shape
    itemsize = jnp.dtype(x.dtype).itemsize
    w = w.astype(jnp.float32)
    len_row = len_s.astype(jnp.int32).reshape(1, B)

    cap = _vmem_capacity_bytes()
    budget = (cap * 3) // 4                  # leave >= 1/4 of physical VMEM free

    if btile is None and not force_two_pass:
        btile = _pick_btile(S, B, D, itemsize, d_chunk, budget)
    if force_two_pass or btile is None:
        return _embed_attention_two_pass(x, w, len_row, d_chunk, cap, budget)

    b_pad = _round_up(B, btile)
    if b_pad != B:
        # TODO(synk): a ragged grid (pl.cdiv(B, btile)) would avoid this pad copy.
        x = jnp.pad(x, ((0, 0), (0, b_pad - B), (0, 0)))
        len_row = jnp.pad(len_row, ((0, 0), (0, b_pad - B)))   # len=0 -> fully masked

    ws = _working_set_bytes(S, D, itemsize, btile, d_chunk)
    vmem_limit = int(min(cap - (4 << 20), max(32 << 20, ws + (8 << 20))))

    x_spec_kw = {}
    if btile < 128:
        # Tiny tiles: per-step compute << DMA issue latency; deepen the pipeline.
        x_spec_kw["pipeline_mode"] = pl.Buffered(3)

    out = pl.pallas_call(
        functools.partial(_embed_attention_kernel, d_chunk=d_chunk),
        out_shape=jax.ShapeDtypeStruct((S, b_pad), jnp.float32),
        grid=(b_pad // btile,),
        in_specs=[
            pl.BlockSpec((S, btile, D), lambda b: (0, b, 0), **x_spec_kw),
            pl.BlockSpec((1, D), lambda b: (0, 0)),
            pl.BlockSpec((1, btile), lambda b: (0, b)),
        ],
        out_specs=pl.BlockSpec((S, btile), lambda b: (0, b)),
        compiler_params=pltpu.CompilerParams(
            dimension_semantics=("parallel",),       # megacore / v7x 2-TC sharding
            vmem_limit_bytes=vmem_limit,
        ),
    )(x, w, len_row)

    if b_pad != B:
        out = out[:, :B]
    return out[..., None]                            # unsqueeze(-1)


def _embed_attention_two_pass(x, w, len_row, d_chunk, cap, budget):
    """Large-S path: stream x exactly once to compute att=(S,B) with lane-dense
    128-wide batch tiles (pass 1), then run the masked softmax over S on the
    small (S,B) array (pass 2)."""
    S, B, D = x.shape
    itemsize = jnp.dtype(x.dtype).itemsize
    dc = min(D, d_chunk)
    btile = 128

    # Largest seq tile (multiple of 8) whose pass-1 working set fits the budget.
    per_row = btile * (2 * D * itemsize + 3 * dc * 4 + 8 * 4)
    stile = max(8, min(_round_up(S, 8), (budget // per_row) // 8 * 8))
    n_s = pl.cdiv(S, stile)
    stile = _round_up(pl.cdiv(S, n_s), 8)            # rebalance to reduce S padding
    s_pad = n_s * stile
    b_pad = _round_up(B, btile)

    if s_pad != S or b_pad != B:
        # TODO(synk): ragged grids would avoid these pad copies of x.
        x = jnp.pad(x, ((0, s_pad - S), (0, b_pad - B), (0, 0)))
    if b_pad != B:
        len_row = jnp.pad(len_row, ((0, 0), (0, b_pad - B)))

    ws1 = (stile * btile * (2 * D * itemsize + 3 * dc * 4)
           + 6 * stile * btile * 4 + (1 << 20))
    vmem1 = int(min(cap - (4 << 20), max(32 << 20, ws1 + (8 << 20))))
    att = pl.pallas_call(
        functools.partial(_att_pass_kernel, d_chunk=d_chunk),
        out_shape=jax.ShapeDtypeStruct((s_pad, b_pad), jnp.float32),
        grid=(b_pad // btile, s_pad // stile),
        in_specs=[
            pl.BlockSpec((stile, btile, D), lambda b, s: (s, b, 0)),
            pl.BlockSpec((1, D), lambda b, s: (0, 0)),
        ],
        out_specs=pl.BlockSpec((stile, btile), lambda b, s: (s, b)),
        compiler_params=pltpu.CompilerParams(
            dimension_semantics=("parallel", "arbitrary"),
            vmem_limit_bytes=vmem1,
        ),
    )(x, w)

    # Pass 2: full-S masked softmax per 128-wide batch tile; the (S, B) array is
    # only S*B*4 bytes so it fits VMEM for any realistic S.
    # TODO(synk): for S beyond ~1e5, add a grid-reduced denominator + normalize sweep.
    ws2 = 8 * s_pad * btile * 4 + (1 << 20)
    vmem2 = int(min(cap - (4 << 20), max(32 << 20, ws2 + (8 << 20))))
    out = pl.pallas_call(
        _softmax_pass_kernel,
        out_shape=jax.ShapeDtypeStruct((s_pad, b_pad), jnp.float32),
        grid=(b_pad // btile,),
        in_specs=[
            pl.BlockSpec((s_pad, btile), lambda b: (0, b)),
            pl.BlockSpec((1, btile), lambda b: (0, b)),
        ],
        out_specs=pl.BlockSpec((s_pad, btile), lambda b: (0, b)),
        compiler_params=pltpu.CompilerParams(
            dimension_semantics=("parallel",),
            vmem_limit_bytes=vmem2,
        ),
    )(att, len_row)
    return out[:S, :B][..., None]


# --------------------------------------------------------------------------
# Reference + self-test
# --------------------------------------------------------------------------
def _reference(x, w, len_s):
    # Pure-JAX mirror of the PyTorch forward (f32 compute, off the MXU).
    xf = x.astype(jnp.float32)
    att = jnp.sum(xf * w.astype(jnp.float32)[0][None, None, :], axis=-1)   # (S, B)
    S = x.shape[0]
    idx = jnp.arange(S, dtype=jnp.int32)[:, None]
    mask = (idx < len_s.astype(jnp.int32)[None, :]).astype(jnp.float32)
    e = jnp.exp(att) * mask
    denom = jnp.sum(e, axis=0, keepdims=True) + 0.0001
    return (e / denom)[..., None]


if __name__ == "__main__":
    key = jax.random.PRNGKey(0)

    def _check(S, B, D, *, dtype=jnp.float32, btile=None, d_chunk=128,
               force_two_pass=False):
        kx, kw, kl = jax.random.split(jax.random.fold_in(key, S * 1000 + B + D), 3)
        x = jax.random.normal(kx, (S, B, D), dtype=jnp.float32).astype(dtype)
        w = 0.1 * jax.random.normal(kw, (1, D), dtype=jnp.float32)
        # the torch module assumes len_s[0] == seq length (sorted descending lengths)
        lens = jax.random.randint(kl, (B,), 1, S + 1).at[0].set(S)
        out = embed_attention(x, w, lens, btile=btile, d_chunk=d_chunk,
                              force_two_pass=force_two_pass)
        jax.block_until_ready(out)
        ref = _reference(x, w, lens)
        assert out.shape == (S, B, 1), out.shape
        err = float(jnp.max(jnp.abs(out - ref)))
        assert jnp.allclose(out, ref, atol=1e-5, rtol=1e-4), err

    # 1) module-implied small shape: seq=8, batch=2, att_size=32
    #    (batch padded to one lane-dense 128-wide tile, len=0 pad columns).
    _check(8, 2, 32)
    # 2) auto-tiled pipelined path: lane-dense tiles, >= 2 grid steps.
    _check(16, 512, 64)
    # 3) same shape, explicit 128-wide tile (grid=(4,)).
    _check(16, 512, 64, btile=128)
    # 4) D-chunked reduction path (D > d_chunk=128).
    _check(8, 16, 512)
    # 5) bf16 streamed input (halved HBM read traffic), f32 compute inside.
    _check(16, 256, 64, dtype=jnp.bfloat16)
    # 6) large-S two-pass path, exercised at a small shape.
    _check(8, 16, 32, force_two_pass=True)

    print("KERNEL_OK")
</pallas_src>

<mosaic_0001>
module attributes {stable_mosaic.version = 11 : i64} {
  func.func @_embed_attention_kernel(%arg0: i32, %arg1: memref<8x128x32xf32, #tpu.memory_space<vmem>>, %arg2: memref<1x32xf32, #tpu.memory_space<vmem>>, %arg3: memref<1x128xi32, #tpu.memory_space<vmem>>, %arg4: memref<8x128xf32, #tpu.memory_space<vmem>>) attributes {dimension_semantics = [#tpu.dimension_semantics<parallel>], iteration_bounds = array<i64: 1>, scalar_prefetch = 0 : i64, scratch_operands = 0 : i64, tpu.core_type = #tpu.core_type<tc>, window_params = [{transform_indices = @transform_0, window_bounds = array<i64: 8, 128, 32>}, {pipeline_mode = #tpu.pipeline_mode<synchronous>, transform_indices = @transform_1, window_bounds = array<i64: 1, 32>}, {transform_indices = @transform_2, window_bounds = array<i64: 1, 128>}, {transform_indices = @transform_3, window_bounds = array<i64: 8, 128>}]} {
    %cst = arith.constant 0.000000e+00 : f32
    %0 = vector.broadcast %cst : f32 to vector<8x128xf32>
    %c0 = arith.constant 0 : index
    %c0_0 = arith.constant 0 : index
    %1 = vector.load %arg2[%c0, %c0_0] : memref<1x32xf32, #tpu.memory_space<vmem>>, vector<1x32xf32>
    %2 = vector.shape_cast %1 : vector<1x32xf32> to vector<32xf32>
    %3 = vector.shape_cast %2 : vector<32xf32> to vector<1x1x32xf32>
    %c0_1 = arith.constant 0 : index
    %c0_2 = arith.constant 0 : index
    %c0_3 = arith.constant 0 : index
    %4 = vector.load %arg1[%c0_1, %c0_2, %c0_3] : memref<8x128x32xf32, #tpu.memory_space<vmem>>, vector<8x128x32xf32>
    %5 = vector.broadcast %3 : vector<1x1x32xf32> to vector<8x128x32xf32>
    %6 = arith.mulf %4, %5 : vector<8x128x32xf32>
    %cst_4 = arith.constant dense<0.000000e+00> : vector<8x128xf32>
    %7 = vector.multi_reduction <add>, %6, %cst_4 [2] : vector<8x128x32xf32> to vector<8x128xf32>
    %8 = arith.addf %0, %7 : vector<8x128xf32>
    %c0_5 = arith.constant 0 : index
    %c0_6 = arith.constant 0 : index
    %9 = vector.load %arg3[%c0_5, %c0_6] : memref<1x128xi32, #tpu.memory_space<vmem>>, vector<1x128xi32>
    %10 = tpu.iota {dimensions = array<i32: 0>} : vector<8x128xi32>
    %11 = vector.broadcast %9 : vector<1x128xi32> to vector<8x128xi32>
    %12 = arith.cmpi slt, %10, %11 : vector<8x128xi32>
    %13 = math.exp %8 : vector<8x128xf32>
    %cst_7 = arith.constant 0.000000e+00 : f32
    %14 = vector.broadcast %cst_7 : f32 to vector<8x128xf32>
    %15 = arith.select %12, %13, %14 : vector<8x128xi1>, vector<8x128xf32>
    %cst_8 = arith.constant dense<0.000000e+00> : vector<128xf32>
    %16 = vector.multi_reduction <add>, %15, %cst_8 [0] : vector<8x128xf32> to vector<128xf32>
    %17 = vector.shape_cast %16 : vector<128xf32> to vector<1x128xf32>
    %cst_9 = arith.constant 9.99999974E-5 : f32
    %18 = vector.broadcast %cst_9 : f32 to vector<1x128xf32>
    %19 = arith.addf %17, %18 : vector<1x128xf32>
    %20 = tpu.reciprocal %19 : vector<1x128xf32> -> vector<1x128xf32>
    %21 = vector.broadcast %20 : vector<1x128xf32> to vector<8x128xf32>
    %22 = arith.mulf %15, %21 : vector<8x128xf32>
    %c0_10 = arith.constant 0 : index
    %c0_11 = arith.constant 0 : index
    %23 = vector.load %arg4[%c0_10, %c0_11] : memref<8x128xf32, #tpu.memory_space<vmem>>, vector<8x128xf32>
    tpu.vector_store %arg4[%c0_10, %c0_11], %22 {strides = array<i32>} : memref<8x128xf32, #tpu.memory_space<vmem>>, vector<8x128xf32>,
    return
  }
  func.func @transform_0(%arg0: i32) -> (i32, i32, i32) {
    %c0_i32 = arith.constant 0 : i32
    %c0_i32_0 = arith.constant 0 : i32
    %c0_i32_1 = arith.constant 0 : i32
    return %c0_i32, %arg0, %c0_i32_0 : i32, i32, i32
  }
  func.func @transform_1(%arg0: i32) -> (i32, i32) {
    %c0_i32 = arith.constant 0 : i32
    %c0_i32_0 = arith.constant 0 : i32
    %c0_i32_1 = arith.constant 0 : i32
    return %c0_i32, %c0_i32_0 : i32, i32
  }
  func.func @transform_2(%arg0: i32) -> (i32, i32) {
    %c0_i32 = arith.constant 0 : i32
    %c0_i32_0 = arith.constant 0 : i32
    return %c0_i32, %arg0 : i32, i32
  }
  func.func @transform_3(%arg0: i32) -> (i32, i32) {
    %c0_i32 = arith.constant 0 : i32
    %c0_i32_0 = arith.constant 0 : i32
    return %c0_i32, %arg0 : i32, i32
  }
}

</mosaic_0001>

<llo_original>
// kernel: tpu_custom_call.1
$region0: #{tpu_custom_call.1}
  #allocation0 [shape = 'u32[]', space=smem, size = 0x4, offset = 0x4, fixed_abs, tag = 'smem constant byte address 0x4 - core index']
  #allocation1 [shape = 'u32[72,128]{1,0:T(1,128)}', space=vmem, size = 0x9000, scoped, tag = 'internal scratch']
  %s0 = inlined_call_operand.vmem [shape: f32[8,128,32], index: 0, kind: input, shape index: {}]
  %s1 = inlined_call_operand.vmem [shape: f32[1,32], index: 1, kind: input, shape index: {}]
  %s2 = inlined_call_operand.vmem [shape: s32[1,128], index: 2, kind: input, shape index: {}]
  %s3 = inlined_call_operand.hbm [shape: f32[8,128], index: 3, kind: output, shape index: {}]
  %s4 = sld [smem:[#allocation0]]
  $region22: #{tpu_custom_call.1} parent=0
    _
  %s6 = ssub.s32 1, %s4
  %s7 = scalar_select 0, %s6, %s4
  $region1: #{tpu_custom_call.1} parent=0
    #allocation2 [shape = 'u8[4096]{0}', space=vmem, size = 0x1000, scoped, tag = 'output window, operand 0, single buffered']
    #allocation3 [shape = 's32[1]{0}', space=sflag, size = 0x4, scoped, tag = 'scoped memory for tpu_custom_call.1']
    %8 = vsyncpa [#allocation3], 0
    // Predicated region
    $region2: #{tpu_custom_call.1} parent=1 // pred_check
      _
    $region3: #{tpu_custom_call.1} parent=1 // pred_check_branch
      %10 = sbr.rel (0) target = $region5
    $region4: #{tpu_custom_call.1} parent=1 // pred_region
      _
    $region5: #{tpu_custom_call.1} parent=1 // pred_fallthru
      _
    // Predicated region
    $region6: #{tpu_custom_call.1} parent=1 // pred_check
      _
    $region7: #{tpu_custom_call.1} parent=1 // pred_check_branch
      %12 = sbr.rel (0) target = $region9
    $region8: #{tpu_custom_call.1} parent=1 // pred_region
      _
    $region9: #{tpu_custom_call.1} parent=1 // pred_fallthru
      _
    // Predicated region
    $region10: #{tpu_custom_call.1} parent=1 // pred_check
      _
    $region11: #{tpu_custom_call.1} parent=1 // pred_check_branch
      %14 = sbr.rel (0) target = $region13
    $region12: #{tpu_custom_call.1} parent=1 // pred_region
      _
    $region13: #{tpu_custom_call.1} parent=1 // pred_fallthru
      _
    %v15 = vld [vmem:[%s1] sm:$0x1]
    %v16 = vld [vmem:[%s0] sm:$0xff]
    %v17 = vld [vmem:[%s0 + $0x8] sm:$0xff]
    %v18 = vld [vmem:[%s0 + $0x10] sm:$0xff]
    %v19 = vld [vmem:[%s0 + $0x18] sm:$0xff]
    %v20 = vld [vmem:[%s0 + $0x20] sm:$0xff]
    %v21 = vld [vmem:[%s0 + $0x28] sm:$0xff]
    %v22 = vld [vmem:[%s0 + $0x30] sm:$0xff]
    %v23 = vld [vmem:[%s0 + $0x38] sm:$0xff]
    %v24 = vld [vmem:[%s0 + $0x40] sm:$0xff]
    %v25 = vld [vmem:[%s0 + $0x48] sm:$0xff]
    %v26 = vld [vmem:[%s0 + $0x50] sm:$0xff]
    %v27 = vld [vmem:[%s0 + $0x58] sm:$0xff]
    %v28 = vld [vmem:[%s0 + $0x60] sm:$0xff]
    %v29 = vld [vmem:[%s0 + $0x68] sm:$0xff]
    %v30 = vld [vmem:[%s0 + $0x70] sm:$0xff]
    %v31 = vld [vmem:[%s0 + $0x78] sm:$0xff]
    %v32 = vld [vmem:[%s0 + $0x80] sm:$0xff]
    %v33 = vld [vmem:[%s0 + $0x88] sm:$0xff]
    %v34 = vld [vmem:[%s0 + $0x90] sm:$0xff]
    %v35 = vld [vmem:[%s0 + $0x98] sm:$0xff]
    %v36 = vld [vmem:[%s0 + $0xa0] sm:$0xff]
    %v37 = vld [vmem:[%s0 + $0xa8] sm:$0xff]
    %v38 = vld [vmem:[%s0 + $0xb0] sm:$0xff]
    %v39 = vld [vmem:[%s0 + $0xb8] sm:$0xff]
    %v40 = vld [vmem:[%s0 + $0xc0] sm:$0xff]
    %v41 = vld [vmem:[%s0 + $0xc8] sm:$0xff]
    %v42 = vld [vmem:[%s0 + $0xd0] sm:$0xff]
    %v43 = vld [vmem:[%s0 + $0xd8] sm:$0xff]
    %v44 = vld [vmem:[%s0 + $0xe0] sm:$0xff]
    %v45 = vld [vmem:[%s0 + $0xe8] sm:$0xff]
    %v46 = vld [vmem:[%s0 + $0xf0] sm:$0xff]
    %v47 = vld [vmem:[%s0 + $0xf8] sm:$0xff]
    %v48 = vld [vmem:[%s0 + $0x100] sm:$0xff]
    %v49 = vld [vmem:[%s0 + $0x108] sm:$0xff]
    %v50 = vld [vmem:[%s0 + $0x110] sm:$0xff]
    %v51 = vld [vmem:[%s0 + $0x118] sm:$0xff]
    %v52 = vld [vmem:[%s0 + $0x120] sm:$0xff]
    %v53 = vld [vmem:[%s0 + $0x128] sm:$0xff]
    %v54 = vld [vmem:[%s0 + $0x130] sm:$0xff]
    %v55 = vld [vmem:[%s0 + $0x138] sm:$0xff]
    %v56 = vld [vmem:[%s0 + $0x140] sm:$0xff]
    %v57 = vld [vmem:[%s0 + $0x148] sm:$0xff]
    %v58 = vld [vmem:[%s0 + $0x150] sm:$0xff]
    %v59 = vld [vmem:[%s0 + $0x158] sm:$0xff]
    %v60 = vld [vmem:[%s0 + $0x160] sm:$0xff]
    %v61 = vld [vmem:[%s0 + $0x168] sm:$0xff]
    %v62 = vld [vmem:[%s0 + $0x170] sm:$0xff]
    %v63 = vld [vmem:[%s0 + $0x178] sm:$0xff]
    %v64 = vld [vmem:[%s0 + $0x180] sm:$0xff]
    %v65 = vld [vmem:[%s0 + $0x188] sm:$0xff]
    %v66 = vld [vmem:[%s0 + $0x190] sm:$0xff]
    %v67 = vld [vmem:[%s0 + $0x198] sm:$0xff]
    %v68 = vld [vmem:[%s0 + $0x1a0] sm:$0xff]
    %v69 = vld [vmem:[%s0 + $0x1a8] sm:$0xff]
    %v70 = vld [vmem:[%s0 + $0x1b0] sm:$0xff]
    %v71 = vld [vmem:[%s0 + $0x1b8] sm:$0xff]
    %v72 = vld [vmem:[%s0 + $0x1c0] sm:$0xff]
    %v73 = vld [vmem:[%s0 + $0x1c8] sm:$0xff]
    %v74 = vld [vmem:[%s0 + $0x1d0] sm:$0xff]
    %v75 = vld [vmem:[%s0 + $0x1d8] sm:$0xff]
    %v76 = vld [vmem:[%s0 + $0x1e0] sm:$0xff]
    %v77 = vld [vmem:[%s0 + $0x1e8] sm:$0xff]
    %v78 = vld [vmem:[%s0 + $0x1f0] sm:$0xff]
    %v79 = vld [vmem:[%s0 + $0x1f8] sm:$0xff]
    %v80 = vld [vmem:[%s0 + $0x200] sm:$0xff]
    %v81 = vld [vmem:[%s0 + $0x208] sm:$0xff]
    %v82 = vld [vmem:[%s0 + $0x210] sm:$0xff]
    %v83 = vld [vmem:[%s0 + $0x218] sm:$0xff]
    %v84 = vld [vmem:[%s0 + $0x220] sm:$0xff]
    %v85 = vld [vmem:[%s0 + $0x228] sm:$0xff]
    %v86 = vld [vmem:[%s0 + $0x230] sm:$0xff]
    %v87 = vld [vmem:[%s0 + $0x238] sm:$0xff]
    %v88 = vld [vmem:[%s0 + $0x240] sm:$0xff]
    %v89 = vld [vmem:[%s0 + $0x248] sm:$0xff]
    %v90 = vld [vmem:[%s0 + $0x250] sm:$0xff]
    %v91 = vld [vmem:[%s0 + $0x258] sm:$0xff]
    %v92 = vld [vmem:[%s0 + $0x260] sm:$0xff]
    %v93 = vld [vmem:[%s0 + $0x268] sm:$0xff]
    %v94 = vld [vmem:[%s0 + $0x270] sm:$0xff]
    %v95 = vld [vmem:[%s0 + $0x278] sm:$0xff]
    %v96 = vld [vmem:[%s0 + $0x280] sm:$0xff]
    %v97 = vld [vmem:[%s0 + $0x288] sm:$0xff]
    %v98 = vld [vmem:[%s0 + $0x290] sm:$0xff]
    %v99 = vld [vmem:[%s0 + $0x298] sm:$0xff]
    %v100 = vld [vmem:[%s0 + $0x2a0] sm:$0xff]
    %v101 = vld [vmem:[%s0 + $0x2a8] sm:$0xff]
    %v102 = vld [vmem:[%s0 + $0x2b0] sm:$0xff]
    %v103 = vld [vmem:[%s0 + $0x2b8] sm:$0xff]
    %v104 = vld [vmem:[%s0 + $0x2c0] sm:$0xff]
    %v105 = vld [vmem:[%s0 + $0x2c8] sm:$0xff]
    %v106 = vld [vmem:[%s0 + $0x2d0] sm:$0xff]
    %v107 = vld [vmem:[%s0 + $0x2d8] sm:$0xff]
    %v108 = vld [vmem:[%s0 + $0x2e0] sm:$0xff]
    %v109 = vld [vmem:[%s0 + $0x2e8] sm:$0xff]
    %v110 = vld [vmem:[%s0 + $0x2f0] sm:$0xff]
    %v111 = vld [vmem:[%s0 + $0x2f8] sm:$0xff]
    %v112 = vld [vmem:[%s0 + $0x300] sm:$0xff]
    %v113 = vld [vmem:[%s0 + $0x308] sm:$0xff]
    %v114 = vld [vmem:[%s0 + $0x310] sm:$0xff]
    %v115 = vld [vmem:[%s0 + $0x318] sm:$0xff]
    %v116 = vld [vmem:[%s0 + $0x320] sm:$0xff]
    %v117 = vld [vmem:[%s0 + $0x328] sm:$0xff]
    %v118 = vld [vmem:[%s0 + $0x330] sm:$0xff]
    %v119 = vld [vmem:[%s0 + $0x338] sm:$0xff]
    %v120 = vld [vmem:[%s0 + $0x340] sm:$0xff]
    %v121 = vld [vmem:[%s0 + $0x348] sm:$0xff]
    %v122 = vld [vmem:[%s0 + $0x350] sm:$0xff]
    %v123 = vld [vmem:[%s0 + $0x358] sm:$0xff]
    %v124 = vld [vmem:[%s0 + $0x360] sm:$0xff]
    %v125 = vld [vmem:[%s0 + $0x368] sm:$0xff]
    %v126 = vld [vmem:[%s0 + $0x370] sm:$0xff]
    %v127 = vld [vmem:[%s0 + $0x378] sm:$0xff]
    %v128 = vld [vmem:[%s0 + $0x380] sm:$0xff]
    %v129 = vld [vmem:[%s0 + $0x388] sm:$0xff]
    %v130 = vld [vmem:[%s0 + $0x390] sm:$0xff]
    %v131 = vld [vmem:[%s0 + $0x398] sm:$0xff]
    %v132 = vld [vmem:[%s0 + $0x3a0] sm:$0xff]
    %v133 = vld [vmem:[%s0 + $0x3a8] sm:$0xff]
    %v134 = vld [vmem:[%s0 + $0x3b0] sm:$0xff]
    %v135 = vld [vmem:[%s0 + $0x3b8] sm:$0xff]
    %v136 = vld [vmem:[%s0 + $0x3c0] sm:$0xff]
    %v137 = vld [vmem:[%s0 + $0x3c8] sm:$0xff]
    %v138 = vld [vmem:[%s0 + $0x3d0] sm:$0xff]
    %v139 = vld [vmem:[%s0 + $0x3d8] sm:$0xff]
    %v140 = vld [vmem:[%s0 + $0x3e0] sm:$0xff]
    %v141 = vld [vmem:[%s0 + $0x3e8] sm:$0xff]
    %v142 = vld [vmem:[%s0 + $0x3f0] sm:$0xff]
    %v143 = vld [vmem:[%s0 + $0x3f8] sm:$0xff]
    %v145 = vperm.slane %v15, 0
    %v147 = vmul.f32 %v16, %v145
    %v148 = vmul.f32 %v17, %v145
    %v149 = vmul.f32 %v18, %v145
    %v150 = vmul.f32 %v19, %v145
    %v151 = vmul.f32 %v20, %v145
    %v152 = vmul.f32 %v21, %v145
    %v153 = vmul.f32 %v22, %v145
    %v154 = vmul.f32 %v23, %v145
    %v155 = vmul.f32 %v24, %v145
    %v156 = vmul.f32 %v25, %v145
    %v157 = vmul.f32 %v26, %v145
    %v158 = vmul.f32 %v27, %v145
    %v159 = vmul.f32 %v28, %v145
    %v160 = vmul.f32 %v29, %v145
    %v161 = vmul.f32 %v30, %v145
    %v162 = vmul.f32 %v31, %v145
    %v163 = vmul.f32 %v32, %v145
    %v164 = vmul.f32 %v33, %v145
    %v165 = vmul.f32 %v34, %v145
    %v166 = vmul.f32 %v35, %v145
    %v167 = vmul.f32 %v36, %v145
    %v168 = vmul.f32 %v37, %v145
    %v169 = vmul.f32 %v38, %v145
    %v170 = vmul.f32 %v39, %v145
    %v171 = vmul.f32 %v40, %v145
    %v172 = vmul.f32 %v41, %v145
    %v173 = vmul.f32 %v42, %v145
    %v174 = vmul.f32 %v43, %v145
    %v175 = vmul.f32 %v44, %v145
    %v176 = vmul.f32 %v45, %v145
    %v177 = vmul.f32 %v46, %v145
    %v178 = vmul.f32 %v47, %v145
    %v179 = vmul.f32 %v48, %v145
    %v180 = vmul.f32 %v49, %v145
    %v181 = vmul.f32 %v50, %v145
    %v182 = vmul.f32 %v51, %v145
    %v183 = vmul.f32 %v52, %v145
    %v184 = vmul.f32 %v53, %v145
    %v185 = vmul.f32 %v54, %v145
    %v186 = vmul.f32 %v55, %v145
    %v187 = vmul.f32 %v56, %v145
    %v188 = vmul.f32 %v57, %v145
    %v189 = vmul.f32 %v58, %v145
    %v190 = vmul.f32 %v59, %v145
    %v191 = vmul.f32 %v60, %v145
    %v192 = vmul.f32 %v61, %v145
    %v193 = vmul.f32 %v62, %v145
    %v194 = vmul.f32 %v63, %v145
    %v195 = vmul.f32 %v64, %v145
    %v196 = vmul.f32 %v65, %v145
    %v197 = vmul.f32 %v66, %v145
    %v198 = vmul.f32 %v67, %v145
    %v199 = vmul.f32 %v68, %v145
    %v200 = vmul.f32 %v69, %v145
    %v201 = vmul.f32 %v70, %v145
    %v202 = vmul.f32 %v71, %v145
    %v203 = vmul.f32 %v72, %v145
    %v204 = vmul.f32 %v73, %v145
    %v205 = vmul.f32 %v74, %v145
    %v206 = vmul.f32 %v75, %v145
    %v207 = vmul.f32 %v76, %v145
    %v208 = vmul.f32 %v77, %v145
    %v209 = vmul.f32 %v78, %v145
    %v210 = vmul.f32 %v79, %v145
    %v211 = vmul.f32 %v80, %v145
    %v212 = vmul.f32 %v81, %v145
    %v213 = vmul.f32 %v82, %v145
    %v214 = vmul.f32 %v83, %v145
    %v215 = vmul.f32 %v84, %v145
    %v216 = vmul.f32 %v85, %v145
    %v217 = vmul.f32 %v86, %v145
    %v218 = vmul.f32 %v87, %v145
    %v219 = vmul.f32 %v88, %v145
    %v220 = vmul.f32 %v89, %v145
    %v221 = vmul.f32 %v90, %v145
    %v222 = vmul.f32 %v91, %v145
    %v223 = vmul.f32 %v92, %v145
    %v224 = vmul.f32 %v93, %v145
    %v225 = vmul.f32 %v94, %v145
    %v226 = vmul.f32 %v95, %v145
    %v227 = vmul.f32 %v96, %v145
    %v228 = vmul.f32 %v97, %v145
    %v229 = vmul.f32 %v98, %v145
    %v230 = vmul.f32 %v99, %v145
    %v231 = vmul.f32 %v100, %v145
    %v232 = vmul.f32 %v101, %v145
    %v233 = vmul.f32 %v102, %v145
    %v234 = vmul.f32 %v103, %v145
    %v235 = vmul.f32 %v104, %v145
    %v236 = vmul.f32 %v105, %v145
    %v237 = vmul.f32 %v106, %v145
    %v238 = vmul.f32 %v107, %v145
    %v239 = vmul.f32 %v108, %v145
    %v240 = vmul.f32 %v109, %v145
    %v241 = vmul.f32 %v110, %v145
    %v242 = vmul.f32 %v111, %v145
    %v243 = vmul.f32 %v112, %v145
    %v244 = vmul.f32 %v113, %v145
    %v245 = vmul.f32 %v114, %v145
    %v246 = vmul.f32 %v115, %v145
    %v247 = vmul.f32 %v116, %v145
    %v248 = vmul.f32 %v117, %v145
    %v249 = vmul.f32 %v118, %v145
    %v250 = vmul.f32 %v119, %v145
    %v251 = vmul.f32 %v120, %v145
    %v252 = vmul.f32 %v121, %v145
    %v253 = vmul.f32 %v122, %v145
    %v254 = vmul.f32 %v123, %v145
    %v255 = vmul.f32 %v124, %v145
    %v256 = vmul.f32 %v125, %v145
    %v257 = vmul.f32 %v126, %v145
    %v258 = vmul.f32 %v127, %v145
    %v259 = vmul.f32 %v128, %v145
    %v260 = vmul.f32 %v129, %v145
    %v261 = vmul.f32 %v130, %v145
    %v262 = vmul.f32 %v131, %v145
    %v263 = vmul.f32 %v132, %v145
    %v264 = vmul.f32 %v133, %v145
    %v265 = vmul.f32 %v134, %v145
    %v266 = vmul.f32 %v135, %v145
    %v267 = vmul.f32 %v136, %v145
    %v268 = vmul.f32 %v137, %v145
    %v269 = vmul.f32 %v138, %v145
    %v270 = vmul.f32 %v139, %v145
    %v271 = vmul.f32 %v140, %v145
    %v272 = vmul.f32 %v141, %v145
    %v273 = vmul.f32 %v142, %v145
    %v274 = vmul.f32 %v143, %v145
    %vm275 = vcmask 261120
    %v276 = vsel %vm275, %v147, 0.0
    %277 = vadd.xlane.f32.xlu0 %v276
    %v278 = vpop.xlane.xlu0 %277
    %v279 = vsel %vm275, %v148, 0.0
    %280 = vadd.xlane.f32.xlu0 %v279
    %v281 = vpop.xlane.xlu0 %280
    %v282 = vsel %vm275, %v149, 0.0
    %283 = vadd.xlane.f32.xlu0 %v282
    %v284 = vpop.xlane.xlu0 %283
    %v285 = vsel %vm275, %v150, 0.0
    %286 = vadd.xlane.f32.xlu0 %v285
    %v287 = vpop.xlane.xlu0 %286
    %v288 = vsel %vm275, %v151, 0.0
    %289 = vadd.xlane.f32.xlu0 %v288
    %v290 = vpop.xlane.xlu0 %289
    %v291 = vsel %vm275, %v152, 0.0
    %292 = vadd.xlane.f32.xlu0 %v291
    %v293 = vpop.xlane.xlu0 %292
    %v294 = vsel %vm275, %v153, 0.0
    %295 = vadd.xlane.f32.xlu0 %v294
    %v296 = vpop.xlane.xlu0 %295
    %v297 = vsel %vm275, %v154, 0.0
    %298 = vadd.xlane.f32.xlu0 %v297
    %v299 = vpop.xlane.xlu0 %298
    %v300 = vsel %vm275, %v155, 0.0
    %301 = vadd.xlane.f32.xlu0 %v300
    %v302 = vpop.xlane.xlu0 %301
    %v303 = vsel %vm275, %v156, 0.0
    %304 = vadd.xlane.f32.xlu0 %v303
    %v305 = vpop.xlane.xlu0 %304
    %v306 = vsel %vm275, %v157, 0.0
    %307 = vadd.xlane.f32.xlu0 %v306
    %v308 = vpop.xlane.xlu0 %307
    %v309 = vsel %vm275, %v158, 0.0
    %310 = vadd.xlane.f32.xlu0 %v309
    %v311 = vpop.xlane.xlu0 %310
    %v312 = vsel %vm275, %v159, 0.0
    %313 = vadd.xlane.f32.xlu0 %v312
    %v314 = vpop.xlane.xlu0 %313
    %v315 = vsel %vm275, %v160, 0.0
    %316 = vadd.xlane.f32.xlu0 %v315
    %v317 = vpop.xlane.xlu0 %316
    %v318 = vsel %vm275, %v161, 0.0
    %319 = vadd.xlane.f32.xlu0 %v318
    %v320 = vpop.xlane.xlu0 %319
    %v321 = vsel %vm275, %v162, 0.0
    %322 = vadd.xlane.f32.xlu0 %v321
    %v323 = vpop.xlane.xlu0 %322
    %v324 = vsel %vm275, %v163, 0.0
    %325 = vadd.xlane.f32.xlu0 %v324
    %v326 = vpop.xlane.xlu0 %325
    %v327 = vsel %vm275, %v164, 0.0
    %328 = vadd.xlane.f32.xlu0 %v327
    %v329 = vpop.xlane.xlu0 %328
    %v330 = vsel %vm275, %v165, 0.0
    %331 = vadd.xlane.f32.xlu0 %v330
    %v332 = vpop.xlane.xlu0 %331
    %v333 = vsel %vm275, %v166, 0.0
    %334 = vadd.xlane.f32.xlu0 %v333
    %v335 = vpop.xlane.xlu0 %334
    %v336 = vsel %vm275, %v167, 0.0
    %337 = vadd.xlane.f32.xlu0 %v336
    %v338 = vpop.xlane.xlu0 %337
    %v339 = vsel %vm275, %v168, 0.0
    %340 = vadd.xlane.f32.xlu0 %v339
    %v341 = vpop.xlane.xlu0 %340
    %v342 = vsel %vm275, %v169, 0.0
    %343 = vadd.xlane.f32.xlu0 %v342
    %v344 = vpop.xlane.xlu0 %343
    %v345 = vsel %vm275, %v170, 0.0
    %346 = vadd.xlane.f32.xlu0 %v345
    %v347 = vpop.xlane.xlu0 %346
    %v348 = vsel %vm275, %v171, 0.0
    %349 = vadd.xlane.f32.xlu0 %v348
    %v350 = vpop.xlane.xlu0 %349
    %v351 = vsel %vm275, %v172, 0.0
    %352 = vadd.xlane.f32.xlu0 %v351
    %v353 = vpop.xlane.xlu0 %352
    %v354 = vsel %vm275, %v173, 0.0
    %355 = vadd.xlane.f32.xlu0 %v354
    %v356 = vpop.xlane.xlu0 %355
    %v357 = vsel %vm275, %v174, 0.0
    %358 = vadd.xlane.f32.xlu0 %v357
    %v359 = vpop.xlane.xlu0 %358
    %v360 = vsel %vm275, %v175, 0.0
    %361 = vadd.xlane.f32.xlu0 %v360
    %v362 = vpop.xlane.xlu0 %361
    %v363 = vsel %vm275, %v176, 0.0
    %364 = vadd.xlane.f32.xlu0 %v363
    %v365 = vpop.xlane.xlu0 %364
    %v366 = vsel %vm275, %v177, 0.0
    %367 = vadd.xlane.f32.xlu0 %v366
    %v368 = vpop.xlane.xlu0 %367
    %v369 = vsel %vm275, %v178, 0.0
    %370 = vadd.xlane.f32.xlu0 %v369
    %v371 = vpop.xlane.xlu0 %370
    %v372 = vsel %vm275, %v179, 0.0
    %373 = vadd.xlane.f32.xlu0 %v372
    %v374 = vpop.xlane.xlu0 %373
    %v375 = vsel %vm275, %v180, 0.0
    %376 = vadd.xlane.f32.xlu0 %v375
    %v377 = vpop.xlane.xlu0 %376
    %v378 = vsel %vm275, %v181, 0.0
    %379 = vadd.xlane.f32.xlu0 %v378
    %v380 = vpop.xlane.xlu0 %379
    %v381 = vsel %vm275, %v182, 0.0
    %382 = vadd.xlane.f32.xlu0 %v381
    %v383 = vpop.xlane.xlu0 %382
    %v384 = vsel %vm275, %v183, 0.0
    %385 = vadd.xlane.f32.xlu0 %v384
    %v386 = vpop.xlane.xlu0 %385
    %v387 = vsel %vm275, %v184, 0.0
    %388 = vadd.xlane.f32.xlu0 %v387
    %v389 = vpop.xlane.xlu0 %388
    %v390 = vsel %vm275, %v185, 0.0
    %391 = vadd.xlane.f32.xlu0 %v390
    %v392 = vpop.xlane.xlu0 %391
    %v393 = vsel %vm275, %v186, 0.0
    %394 = vadd.xlane.f32.xlu0 %v393
    %v395 = vpop.xlane.xlu0 %394
    %v396 = vsel %vm275, %v187, 0.0
    %397 = vadd.xlane.f32.xlu0 %v396
    %v398 = vpop.xlane.xlu0 %397
    %v399 = vsel %vm275, %v188, 0.0
    %400 = vadd.xlane.f32.xlu0 %v399
    %v401 = vpop.xlane.xlu0 %400
    %v402 = vsel %vm275, %v189, 0.0
    %403 = vadd.xlane.f32.xlu0 %v402
    %v404 = vpop.xlane.xlu0 %403
    %v405 = vsel %vm275, %v190, 0.0
    %406 = vadd.xlane.f32.xlu0 %v405
    %v407 = vpop.xlane.xlu0 %406
    %v408 = vsel %vm275, %v191, 0.0
    %409 = vadd.xlane.f32.xlu0 %v408
    %v410 = vpop.xlane.xlu0 %409
    %v411 = vsel %vm275, %v192, 0.0
    %412 = vadd.xlane.f32.xlu0 %v411
    %v413 = vpop.xlane.xlu0 %412
    %v414 = vsel %vm275, %v193, 0.0
    %415 = vadd.xlane.f32.xlu0 %v414
    %v416 = vpop.xlane.xlu0 %415
    %v417 = vsel %vm275, %v194, 0.0
    %418 = vadd.xlane.f32.xlu0 %v417
    %v419 = vpop.xlane.xlu0 %418
    %v420 = vsel %vm275, %v195, 0.0
    %421 = vadd.xlane.f32.xlu0 %v420
    %v422 = vpop.xlane.xlu0 %421
    %v423 = vsel %vm275, %v196, 0.0
    %424 = vadd.xlane.f32.xlu0 %v423
    %v425 = vpop.xlane.xlu0 %424
    %v426 = vsel %vm275, %v197, 0.0
    %427 = vadd.xlane.f32.xlu0 %v426
    %v428 = vpop.xlane.xlu0 %427
    %v429 = vsel %vm275, %v198, 0.0
    %430 = vadd.xlane.f32.xlu0 %v429
    %v431 = vpop.xlane.xlu0 %430
    %v432 = vsel %vm275, %v199, 0.0
    %433 = vadd.xlane.f32.xlu0 %v432
    %v434 = vpop.xlane.xlu0 %433
    %v435 = vsel %vm275, %v200, 0.0
    %436 = vadd.xlane.f32.xlu0 %v435
    %v437 = vpop.xlane.xlu0 %436
    %v438 = vsel %vm275, %v201, 0.0
    %439 = vadd.xlane.f32.xlu0 %v438
    %v440 = vpop.xlane.xlu0 %439
    %v441 = vsel %vm275, %v202, 0.0
    %442 = vadd.xlane.f32.xlu0 %v441
    %v443 = vpop.xlane.xlu0 %442
    %v444 = vsel %vm275, %v203, 0.0
    %445 = vadd.xlane.f32.xlu0 %v444
    %v446 = vpop.xlane.xlu0 %445
    %v447 = vsel %vm275, %v204, 0.0
    %448 = vadd.xlane.f32.xlu0 %v447
    %v449 = vpop.xlane.xlu0 %448
    %v450 = vsel %vm275, %v205, 0.0
    %451 = vadd.xlane.f32.xlu0 %v450
    %v452 = vpop.xlane.xlu0 %451
    %v453 = vsel %vm275, %v206, 0.0
    %454 = vadd.xlane.f32.xlu0 %v453
    %v455 = vpop.xlane.xlu0 %454
    %v456 = vsel %vm275, %v207, 0.0
    %457 = vadd.xlane.f32.xlu0 %v456
    %v458 = vpop.xlane.xlu0 %457
    %v459 = vsel %vm275, %v208, 0.0
    %460 = vadd.xlane.f32.xlu0 %v459
    %v461 = vpop.xlane.xlu0 %460
    %v462 = vsel %vm275, %v209, 0.0
    %463 = vadd.xlane.f32.xlu0 %v462
    %v464 = vpop.xlane.xlu0 %463
    %v465 = vsel %vm275, %v210, 0.0
    %466 = vadd.xlane.f32.xlu0 %v465
    %v467 = vpop.xlane.xlu0 %466
    %v468 = vsel %vm275, %v211, 0.0
    %469 = vadd.xlane.f32.xlu0 %v468
    %v470 = vpop.xlane.xlu0 %469
    %v471 = vsel %vm275, %v212, 0.0
    %472 = vadd.xlane.f32.xlu0 %v471
    %v473 = vpop.xlane.xlu0 %472
    %v474 = vsel %vm275, %v213, 0.0
    %475 = vadd.xlane.f32.xlu0 %v474
    %v476 = vpop.xlane.xlu0 %475
    %v477 = vsel %vm275, %v214, 0.0
    %478 = vadd.xlane.f32.xlu0 %v477
    %v479 = vpop.xlane.xlu0 %478
    %v480 = vsel %vm275, %v215, 0.0
    %481 = vadd.xlane.f32.xlu0 %v480
    %v482 = vpop.xlane.xlu0 %481
    %v483 = vsel %vm275, %v216, 0.0
    %484 = vadd.xlane.f32.xlu0 %v483
    %v485 = vpop.xlane.xlu0 %484
    %v486 = vsel %vm275, %v217, 0.0
    %487 = vadd.xlane.f32.xlu0 %v486
    %v488 = vpop.xlane.xlu0 %487
    %v489 = vsel %vm275, %v218, 0.0
    %490 = vadd.xlane.f32.xlu0 %v489
    %v491 = vpop.xlane.xlu0 %490
    %v492 = vsel %vm275, %v219, 0.0
    %493 = vadd.xlane.f32.xlu0 %v492
    %v494 = vpop.xlane.xlu0 %493
    %v495 = vsel %vm275, %v220, 0.0
    %496 = vadd.xlane.f32.xlu0 %v495
    %v497 = vpop.xlane.xlu0 %496
    %v498 = vsel %vm275, %v221, 0.0
    %499 = vadd.xlane.f32.xlu0 %v498
    %v500 = vpop.xlane.xlu0 %499
    %v501 = vsel %vm275, %v222, 0.0
    %502 = vadd.xlane.f32.xlu0 %v501
    %v503 = vpop.xlane.xlu0 %502
    %v504 = vsel %vm275, %v223, 0.0
    %505 = vadd.xlane.f32.xlu0 %v504
    %v506 = vpop.xlane.xlu0 %505
    %v507 = vsel %vm275, %v224, 0.0
    %508 = vadd.xlane.f32.xlu0 %v507
    %v509 = vpop.xlane.xlu0 %508
    %v510 = vsel %vm275, %v225, 0.0
    %511 = vadd.xlane.f32.xlu0 %v510
    %v512 = vpop.xlane.xlu0 %511
    %v513 = vsel %vm275, %v226, 0.0
    %514 = vadd.xlane.f32.xlu0 %v513
    %v515 = vpop.xlane.xlu0 %514
    %v516 = vsel %vm275, %v227, 0.0
    %517 = vadd.xlane.f32.xlu0 %v516
    %v518 = vpop.xlane.xlu0 %517
    %v519 = vsel %vm275, %v228, 0.0
    %520 = vadd.xlane.f32.xlu0 %v519
    %v521 = vpop.xlane.xlu0 %520
    %v522 = vsel %vm275, %v229, 0.0
    %523 = vadd.xlane.f32.xlu0 %v522
    %v524 = vpop.xlane.xlu0 %523
    %v525 = vsel %vm275, %v230, 0.0
    %526 = vadd.xlane.f32.xlu0 %v525
    %v527 = vpop.xlane.xlu0 %526
    %v528 = vsel %vm275, %v231, 0.0
    %529 = vadd.xlane.f32.xlu0 %v528
    %v530 = vpop.xlane.xlu0 %529
    %v531 = vsel %vm275, %v232, 0.0
    %532 = vadd.xlane.f32.xlu0 %v531
    %v533 = vpop.xlane.xlu0 %532
    %v534 = vsel %vm275, %v233, 0.0
    %535 = vadd.xlane.f32.xlu0 %v534
    %v536 = vpop.xlane.xlu0 %535
    %v537 = vsel %vm275, %v234, 0.0
    %538 = vadd.xlane.f32.xlu0 %v537
    %v539 = vpop.xlane.xlu0 %538
    %v540 = vsel %vm275, %v235, 0.0
    %541 = vadd.xlane.f32.xlu0 %v540
    %v542 = vpop.xlane.xlu0 %541
    %v543 = vsel %vm275, %v236, 0.0
    %544 = vadd.xlane.f32.xlu0 %v543
    %v545 = vpop.xlane.xlu0 %544
    %v546 = vsel %vm275, %v237, 0.0
    %547 = vadd.xlane.f32.xlu0 %v546
    %v548 = vpop.xlane.xlu0 %547
    %v549 = vsel %vm275, %v238, 0.0
    %550 = vadd.xlane.f32.xlu0 %v549
    %v551 = vpop.xlane.xlu0 %550
    %v552 = vsel %vm275, %v239, 0.0
    %553 = vadd.xlane.f32.xlu0 %v552
    %v554 = vpop.xlane.xlu0 %553
    %v555 = vsel %vm275, %v240, 0.0
    %556 = vadd.xlane.f32.xlu0 %v555
    %v557 = vpop.xlane.xlu0 %556
    %v558 = vsel %vm275, %v241, 0.0
    %559 = vadd.xlane.f32.xlu0 %v558
    %v560 = vpop.xlane.xlu0 %559
    %v561 = vsel %vm275, %v242, 0.0
    %562 = vadd.xlane.f32.xlu0 %v561
    %v563 = vpop.xlane.xlu0 %562
    %v564 = vsel %vm275, %v243, 0.0
    %565 = vadd.xlane.f32.xlu0 %v564
    %v566 = vpop.xlane.xlu0 %565
    %v567 = vsel %vm275, %v244, 0.0
    %568 = vadd.xlane.f32.xlu0 %v567
    %v569 = vpop.xlane.xlu0 %568
    %v570 = vsel %vm275, %v245, 0.0
    %571 = vadd.xlane.f32.xlu0 %v570
    %v572 = vpop.xlane.xlu0 %571
    %v573 = vsel %vm275, %v246, 0.0
    %574 = vadd.xlane.f32.xlu0 %v573
    %v575 = vpop.xlane.xlu0 %574
    %v576 = vsel %vm275, %v247, 0.0
    %577 = vadd.xlane.f32.xlu0 %v576
    %v578 = vpop.xlane.xlu0 %577
    %v579 = vsel %vm275, %v248, 0.0
    %580 = vadd.xlane.f32.xlu0 %v579
    %v581 = vpop.xlane.xlu0 %580
    %v582 = vsel %vm275, %v249, 0.0
    %583 = vadd.xlane.f32.xlu0 %v582
    %v584 = vpop.xlane.xlu0 %583
    %v585 = vsel %vm275, %v250, 0.0
    %586 = vadd.xlane.f32.xlu0 %v585
    %v587 = vpop.xlane.xlu0 %586
    %v588 = vsel %vm275, %v251, 0.0
    %589 = vadd.xlane.f32.xlu0 %v588
    %v590 = vpop.xlane.xlu0 %589
    %v591 = vsel %vm275, %v252, 0.0
    %592 = vadd.xlane.f32.xlu0 %v591
    %v593 = vpop.xlane.xlu0 %592
    %v594 = vsel %vm275, %v253, 0.0
    %595 = vadd.xlane.f32.xlu0 %v594
    %v596 = vpop.xlane.xlu0 %595
    %v597 = vsel %vm275, %v254, 0.0
    %598 = vadd.xlane.f32.xlu0 %v597
    %v599 = vpop.xlane.xlu0 %598
    %v600 = vsel %vm275, %v255, 0.0
    %601 = vadd.xlane.f32.xlu0 %v600
    %v602 = vpop.xlane.xlu0 %601
    %v603 = vsel %vm275, %v256, 0.0
    %604 = vadd.xlane.f32.xlu0 %v603
    %v605 = vpop.xlane.xlu0 %604
    %v606 = vsel %vm275, %v257, 0.0
    %607 = vadd.xlane.f32.xlu0 %v606
    %v608 = vpop.xlane.xlu0 %607
    %v609 = vsel %vm275, %v258, 0.0
    %610 = vadd.xlane.f32.xlu0 %v609
    %v611 = vpop.xlane.xlu0 %610
    %v612 = vsel %vm275, %v259, 0.0
    %613 = vadd.xlane.f32.xlu0 %v612
    %v614 = vpop.xlane.xlu0 %613
    %v615 = vsel %vm275, %v260, 0.0
    %616 = vadd.xlane.f32.xlu0 %v615
    %v617 = vpop.xlane.xlu0 %616
    %v618 = vsel %vm275, %v261, 0.0
    %619 = vadd.xlane.f32.xlu0 %v618
    %v620 = vpop.xlane.xlu0 %619
    %v621 = vsel %vm275, %v262, 0.0
    %622 = vadd.xlane.f32.xlu0 %v621
    %v623 = vpop.xlane.xlu0 %622
    %v624 = vsel %vm275, %v263, 0.0
    %625 = vadd.xlane.f32.xlu0 %v624
    %v626 = vpop.xlane.xlu0 %625
    %v627 = vsel %vm275, %v264, 0.0
    %628 = vadd.xlane.f32.xlu0 %v627
    %v629 = vpop.xlane.xlu0 %628
    %v630 = vsel %vm275, %v265, 0.0
    %631 = vadd.xlane.f32.xlu0 %v630
    %v632 = vpop.xlane.xlu0 %631
    %v633 = vsel %vm275, %v266, 0.0
    %634 = vadd.xlane.f32.xlu0 %v633
    %v635 = vpop.xlane.xlu0 %634
    %v636 = vsel %vm275, %v267, 0.0
    %637 = vadd.xlane.f32.xlu0 %v636
    %v638 = vpop.xlane.xlu0 %637
    %v639 = vsel %vm275, %v268, 0.0
    %640 = vadd.xlane.f32.xlu0 %v639
    %v641 = vpop.xlane.xlu0 %640
    %v642 = vsel %vm275, %v269, 0.0
    %643 = vadd.xlane.f32.xlu0 %v642
    %v644 = vpop.xlane.xlu0 %643
    %v645 = vsel %vm275, %v270, 0.0
    %646 = vadd.xlane.f32.xlu0 %v645
    %v647 = vpop.xlane.xlu0 %646
    %v648 = vsel %vm275, %v271, 0.0
    %649 = vadd.xlane.f32.xlu0 %v648
    %v650 = vpop.xlane.xlu0 %649
    %v651 = vsel %vm275, %v272, 0.0
    %652 = vadd.xlane.f32.xlu0 %v651
    %v653 = vpop.xlane.xlu0 %652
    %v654 = vsel %vm275, %v273, 0.0
    %655 = vadd.xlane.f32.xlu0 %v654
    %v656 = vpop.xlane.xlu0 %655
    %v657 = vsel %vm275, %v274, 0.0
    %658 = vadd.xlane.f32.xlu0 %v657
    %v659 = vpop.xlane.xlu0 %658
    %v660 = vadd.f32 %v278, 0.0
    %v661 = vadd.f32 %v281, 0.0
    %v662 = vadd.f32 %v284, 0.0
    %v663 = vadd.f32 %v287, 0.0
    %v664 = vadd.f32 %v290, 0.0
    %v665 = vadd.f32 %v293, 0.0
    %v666 = vadd.f32 %v296, 0.0
    %v667 = vadd.f32 %v299, 0.0
    %v668 = vadd.f32 %v302, 0.0
    %v669 = vadd.f32 %v305, 0.0
    %v670 = vadd.f32 %v308, 0.0
    %v671 = vadd.f32 %v311, 0.0
    %v672 = vadd.f32 %v314, 0.0
    %v673 = vadd.f32 %v317, 0.0
    %v674 = vadd.f32 %v320, 0.0
    %v675 = vadd.f32 %v323, 0.0
    %v676 = vadd.f32 %v326, 0.0
    %v677 = vadd.f32 %v329, 0.0
    %v678 = vadd.f32 %v332, 0.0
    %v679 = vadd.f32 %v335, 0.0
    %v680 = vadd.f32 %v338, 0.0
    %v681 = vadd.f32 %v341, 0.0
    %v682 = vadd.f32 %v344, 0.0
    %v683 = vadd.f32 %v347, 0.0
    %v684 = vadd.f32 %v350, 0.0
    %v685 = vadd.f32 %v353, 0.0
    %v686 = vadd.f32 %v356, 0.0
    %v687 = vadd.f32 %v359, 0.0
    %v688 = vadd.f32 %v362, 0.0
    %v689 = vadd.f32 %v365, 0.0
    %v690 = vadd.f32 %v368, 0.0
    %v691 = vadd.f32 %v371, 0.0
    %v692 = vadd.f32 %v374, 0.0
    %v693 = vadd.f32 %v377, 0.0
    %v694 = vadd.f32 %v380, 0.0
    %v695 = vadd.f32 %v383, 0.0
    %v696 = vadd.f32 %v386, 0.0
    %v697 = vadd.f32 %v389, 0.0
    %v698 = vadd.f32 %v392, 0.0
    %v699 = vadd.f32 %v395, 0.0
    %v700 = vadd.f32 %v398, 0.0
    %v701 = vadd.f32 %v401, 0.0
    %v702 = vadd.f32 %v404, 0.0
    %v703 = vadd.f32 %v407, 0.0
    %v704 = vadd.f32 %v410, 0.0
    %v705 = vadd.f32 %v413, 0.0
    %v706 = vadd.f32 %v416, 0.0
    %v707 = vadd.f32 %v419, 0.0
    %v708 = vadd.f32 %v422, 0.0
    %v709 = vadd.f32 %v425, 0.0
    %v710 = vadd.f32 %v428, 0.0
    %v711 = vadd.f32 %v431, 0.0
    %v712 = vadd.f32 %v434, 0.0
    %v713 = vadd.f32 %v437, 0.0
    %v714 = vadd.f32 %v440, 0.0
    %v715 = vadd.f32 %v443, 0.0
    %v716 = vadd.f32 %v446, 0.0
    %v717 = vadd.f32 %v449, 0.0
    %v718 = vadd.f32 %v452, 0.0
    %v719 = vadd.f32 %v455, 0.0
    %v720 = vadd.f32 %v458, 0.0
    %v721 = vadd.f32 %v461, 0.0
    %v722 = vadd.f32 %v464, 0.0
    %v723 = vadd.f32 %v467, 0.0
    %v724 = vadd.f32 %v470, 0.0
    %v725 = vadd.f32 %v473, 0.0
    %v726 = vadd.f32 %v476, 0.0
    %v727 = vadd.f32 %v479, 0.0
    %v728 = vadd.f32 %v482, 0.0
    %v729 = vadd.f32 %v485, 0.0
    %v730 = vadd.f32 %v488, 0.0
    %v731 = vadd.f32 %v491, 0.0
    %v732 = vadd.f32 %v494, 0.0
    %v733 = vadd.f32 %v497, 0.0
    %v734 = vadd.f32 %v500, 0.0
    %v735 = vadd.f32 %v503, 0.0
    %v736 = vadd.f32 %v506, 0.0
    %v737 = vadd.f32 %v509, 0.0
    %v738 = vadd.f32 %v512, 0.0
    %v739 = vadd.f32 %v515, 0.0
    %v740 = vadd.f32 %v518, 0.0
    %v741 = vadd.f32 %v521, 0.0
    %v742 = vadd.f32 %v524, 0.0
    %v743 = vadd.f32 %v527, 0.0
    %v744 = vadd.f32 %v530, 0.0
    %v745 = vadd.f32 %v533, 0.0
    %v746 = vadd.f32 %v536, 0.0
    %v747 = vadd.f32 %v539, 0.0
    %v748 = vadd.f32 %v542, 0.0
    %v749 = vadd.f32 %v545, 0.0
    %v750 = vadd.f32 %v548, 0.0
    %v751 = vadd.f32 %v551, 0.0
    %v752 = vadd.f32 %v554, 0.0
    %v753 = vadd.f32 %v557, 0.0
    %v754 = vadd.f32 %v560, 0.0
    %v755 = vadd.f32 %v563, 0.0
    %v756 = vadd.f32 %v566, 0.0
    %v757 = vadd.f32 %v569, 0.0
    %v758 = vadd.f32 %v572, 0.0
    %v759 = vadd.f32 %v575, 0.0
    %v760 = vadd.f32 %v578, 0.0
    %v761 = vadd.f32 %v581, 0.0
    %v762 = vadd.f32 %v584, 0.0
    %v763 = vadd.f32 %v587, 0.0
    %v764 = vadd.f32 %v590, 0.0
    %v765 = vadd.f32 %v593, 0.0
    %v766 = vadd.f32 %v596, 0.0
    %v767 = vadd.f32 %v599, 0.0
    %v768 = vadd.f32 %v602, 0.0
    %v769 = vadd.f32 %v605, 0.0
    %v770 = vadd.f32 %v608, 0.0
    %v771 = vadd.f32 %v611, 0.0
    %v772 = vadd.f32 %v614, 0.0
    %v773 = vadd.f32 %v617, 0.0
    %v774 = vadd.f32 %v620, 0.0
    %v775 = vadd.f32 %v623, 0.0
    %v776 = vadd.f32 %v626, 0.0
    %v777 = vadd.f32 %v629, 0.0
    %v778 = vadd.f32 %v632, 0.0
    %v779 = vadd.f32 %v635, 0.0
    %v780 = vadd.f32 %v638, 0.0
    %v781 = vadd.f32 %v641, 0.0
    %v782 = vadd.f32 %v644, 0.0
    %v783 = vadd.f32 %v647, 0.0
    %v784 = vadd.f32 %v650, 0.0
    %v785 = vadd.f32 %v653, 0.0
    %v786 = vadd.f32 %v656, 0.0
    %v787 = vadd.f32 %v659, 0.0
    %v788 = vld [vmem:[%s2] sm:$0x1]
    %v789 = vlaneseq
    %v790 = vshrl.u32 %v789, 7
    %v791 = vperm.slane %v788, 0
    %vm792 = vcmp.lt.s32.totalorder %v790, %v791
    %v793 = vmul.f32 %v660, 1.442695
    %v794 = vpow.pop %v793
    %v795 = vmul.f32 %v661, 1.442695
    %v796 = vpow.pop %v795
    %v797 = vmul.f32 %v662, 1.442695
    %v798 = vpow.pop %v797
    %v799 = vmul.f32 %v663, 1.442695
    %v800 = vpow.pop %v799
    %v801 = vmul.f32 %v664, 1.442695
    %v802 = vpow.pop %v801
    %v803 = vmul.f32 %v665, 1.442695
    %v804 = vpow.pop %v803
    %v805 = vmul.f32 %v666, 1.442695
    %v806 = vpow.pop %v805
    %v807 = vmul.f32 %v667, 1.442695
    %v808 = vpow.pop %v807
    %v809 = vmul.f32 %v668, 1.442695
    %v810 = vpow.pop %v809
    %v811 = vmul.f32 %v669, 1.442695
    %v812 = vpow.pop %v811
    %v813 = vmul.f32 %v670, 1.442695
    %v814 = vpow.pop %v813
    %v815 = vmul.f32 %v671, 1.442695
    %v816 = vpow.pop %v815
    %v817 = vmul.f32 %v672, 1.442695
    %v818 = vpow.pop %v817
    %v819 = vmul.f32 %v673, 1.442695
    %v820 = vpow.pop %v819
    %v821 = vmul.f32 %v674, 1.442695
    %v822 = vpow.pop %v821
    %v823 = vmul.f32 %v675, 1.442695
    %v824 = vpow.pop %v823
    %v825 = vmul.f32 %v676, 1.442695
    %v826 = vpow.pop %v825
    %v827 = vmul.f32 %v677, 1.442695
    %v828 = vpow.pop %v827
    %v829 = vmul.f32 %v678, 1.442695
    %v830 = vpow.pop %v829
    %v831 = vmul.f32 %v679, 1.442695
    %v832 = vpow.pop %v831
    %v833 = vmul.f32 %v680, 1.442695
    %v834 = vpow.pop %v833
    %v835 = vmul.f32 %v681, 1.442695
    %v836 = vpow.pop %v835
    %v837 = vmul.f32 %v682, 1.442695
    %v838 = vpow.pop %v837
    %v839 = vmul.f32 %v683, 1.442695
    %v840 = vpow.pop %v839
    %v841 = vmul.f32 %v684, 1.442695
    %v842 = vpow.pop %v841
    %v843 = vmul.f32 %v685, 1.442695
    %v844 = vpow.pop %v843
    %v845 = vmul.f32 %v686, 1.442695
    %v846 = vpow.pop %v845
    %v847 = vmul.f32 %v687, 1.442695
    %v848 = vpow.pop %v847
    %v849 = vmul.f32 %v688, 1.442695
    %v850 = vpow.pop %v849
    %v851 = vmul.f32 %v689, 1.442695
    %v852 = vpow.pop %v851
    %v853 = vmul.f32 %v690, 1.442695
    %v854 = vpow.pop %v853
    %v855 = vmul.f32 %v691, 1.442695
    %v856 = vpow.pop %v855
    %v857 = vmul.f32 %v692, 1.442695
    %v858 = vpow.pop %v857
    %v859 = vmul.f32 %v693, 1.442695
    %v860 = vpow.pop %v859
    %v861 = vmul.f32 %v694, 1.442695
    %v862 = vpow.pop %v861
    %v863 = vmul.f32 %v695, 1.442695
    %v864 = vpow.pop %v863
    %v865 = vmul.f32 %v696, 1.442695
    %v866 = vpow.pop %v865
    %v867 = vmul.f32 %v697, 1.442695
    %v868 = vpow.pop %v867
    %v869 = vmul.f32 %v698, 1.442695
    %v870 = vpow.pop %v869
    %v871 = vmul.f32 %v699, 1.442695
    %v872 = vpow.pop %v871
    %v873 = vmul.f32 %v700, 1.442695
    %v874 = vpow.pop %v873
    %v875 = vmul.f32 %v701, 1.442695
    %v876 = vpow.pop %v875
    %v877 = vmul.f32 %v702, 1.442695
    %v878 = vpow.pop %v877
    %v879 = vmul.f32 %v703, 1.442695
    %v880 = vpow.pop %v879
    %v881 = vmul.f32 %v704, 1.442695
    %v882 = vpow.pop %v881
    %v883 = vmul.f32 %v705, 1.442695
    %v884 = vpow.pop %v883
    %v885 = vmul.f32 %v706, 1.442695
    %v886 = vpow.pop %v885
    %v887 = vmul.f32 %v707, 1.442695
    %v888 = vpow.pop %v887
    %v889 = vmul.f32 %v708, 1.442695
    %v890 = vpow.pop %v889
    %v891 = vmul.f32 %v709, 1.442695
    %v892 = vpow.pop %v891
    %v893 = vmul.f32 %v710, 1.442695
    %v894 = vpow.pop %v893
    %v895 = vmul.f32 %v711, 1.442695
    %v896 = vpow.pop %v895
    %v897 = vmul.f32 %v712, 1.442695
    %v898 = vpow.pop %v897
    %v899 = vmul.f32 %v713, 1.442695
    %v900 = vpow.pop %v899
    %v901 = vmul.f32 %v714, 1.442695
    %v902 = vpow.pop %v901
    %v903 = vmul.f32 %v715, 1.442695
    %v904 = vpow.pop %v903
    %v905 = vmul.f32 %v716, 1.442695
    %v906 = vpow.pop %v905
    %v907 = vmul.f32 %v717, 1.442695
    %v908 = vpow.pop %v907
    %v909 = vmul.f32 %v718, 1.442695
    %v910 = vpow.pop %v909
    %v911 = vmul.f32 %v719, 1.442695
    %v912 = vpow.pop %v911
    %v913 = vmul.f32 %v720, 1.442695
    %v914 = vpow.pop %v913
    %v915 = vmul.f32 %v721, 1.442695
    %v916 = vpow.pop %v915
    %v917 = vmul.f32 %v722, 1.442695
    %v918 = vpow.pop %v917
    %v919 = vmul.f32 %v723, 1.442695
    %v920 = vpow.pop %v919
    %v921 = vmul.f32 %v724, 1.442695
    %v922 = vpow.pop %v921
    %v923 = vmul.f32 %v725, 1.442695
    %v924 = vpow.pop %v923
    %v925 = vmul.f32 %v726, 1.442695
    %v926 = vpow.pop %v925
    %v927 = vmul.f32 %v727, 1.442695
    %v928 = vpow.pop %v927
    %v929 = vmul.f32 %v728, 1.442695
    %v930 = vpow.pop %v929
    %v931 = vmul.f32 %v729, 1.442695
    %v932 = vpow.pop %v931
    %v933 = vmul.f32 %v730, 1.442695
    %v934 = vpow.pop %v933
    %v935 = vmul.f32 %v731, 1.442695
    %v936 = vpow.pop %v935
    %v937 = vmul.f32 %v732, 1.442695
    %v938 = vpow.pop %v937
    %v939 = vmul.f32 %v733, 1.442695
    %v940 = vpow.pop %v939
    %v941 = vmul.f32 %v734, 1.442695
    %v942 = vpow.pop %v941
    %v943 = vmul.f32 %v735, 1.442695
    %v944 = vpow.pop %v943
    %v945 = vmul.f32 %v736, 1.442695
    %v946 = vpow.pop %v945
    %v947 = vmul.f32 %v737, 1.442695
    %v948 = vpow.pop %v947
    %v949 = vmul.f32 %v738, 1.442695
    %v950 = vpow.pop %v949
    %v951 = vmul.f32 %v739, 1.442695
    %v952 = vpow.pop %v951
    %v953 = vmul.f32 %v740, 1.442695
    %v954 = vpow.pop %v953
    %v955 = vmul.f32 %v741, 1.442695
    %v956 = vpow.pop %v955
    %v957 = vmul.f32 %v742, 1.442695
    %v958 = vpow.pop %v957
    %v959 = vmul.f32 %v743, 1.442695
    %v960 = vpow.pop %v959
    %v961 = vmul.f32 %v744, 1.442695
    %v962 = vpow.pop %v961
    %v963 = vmul.f32 %v745, 1.442695
    %v964 = vpow.pop %v963
    %v965 = vmul.f32 %v746, 1.442695
    %v966 = vpow.pop %v965
    %v967 = vmul.f32 %v747, 1.442695
    %v968 = vpow.pop %v967
    %v969 = vmul.f32 %v748, 1.442695
    %v970 = vpow.pop %v969
    %v971 = vmul.f32 %v749, 1.442695
    %v972 = vpow.pop %v971
    %v973 = vmul.f32 %v750, 1.442695
    %v974 = vpow.pop %v973
    %v975 = vmul.f32 %v751, 1.442695
    %v976 = vpow.pop %v975
    %v977 = vmul.f32 %v752, 1.442695
    %v978 = vpow.pop %v977
    %v979 = vmul.f32 %v753, 1.442695
    %v980 = vpow.pop %v979
    %v981 = vmul.f32 %v754, 1.442695
    %v982 = vpow.pop %v981
    %v983 = vmul.f32 %v755, 1.442695
    %v984 = vpow.pop %v983
    %v985 = vmul.f32 %v756, 1.442695
    %v986 = vpow.pop %v985
    %v987 = vmul.f32 %v757, 1.442695
    %v988 = vpow.pop %v987
    %v989 = vmul.f32 %v758, 1.442695
    %v990 = vpow.pop %v989
    %v991 = vmul.f32 %v759, 1.442695
    %v992 = vpow.pop %v991
    %v993 = vmul.f32 %v760, 1.442695
    %v994 = vpow.pop %v993
    %v995 = vmul.f32 %v761, 1.442695
    %v996 = vpow.pop %v995
    %v997 = vmul.f32 %v762, 1.442695
    %v998 = vpow.pop %v997
    %v999 = vmul.f32 %v763, 1.442695
    %v1000 = vpow.pop %v999
    %v1001 = vmul.f32 %v764, 1.442695
    %v1002 = vpow.pop %v1001
    %v1003 = vmul.f32 %v765, 1.442695
    %v1004 = vpow.pop %v1003
    %v1005 = vmul.f32 %v766, 1.442695
    %v1006 = vpow.pop %v1005
    %v1007 = vmul.f32 %v767, 1.442695
    %v1008 = vpow.pop %v1007
    %v1009 = vmul.f32 %v768, 1.442695
    %v1010 = vpow.pop %v1009
    %v1011 = vmul.f32 %v769, 1.442695
    %v1012 = vpow.pop %v1011
    %v1013 = vmul.f32 %v770, 1.442695
    %v1014 = vpow.pop %v1013
    %v1015 = vmul.f32 %v771, 1.442695
    %v1016 = vpow.pop %v1015
    %v1017 = vmul.f32 %v772, 1.442695
    %v1018 = vpow.pop %v1017
    %v1019 = vmul.f32 %v773, 1.442695
    %v1020 = vpow.pop %v1019
    %v1021 = vmul.f32 %v774, 1.442695
    %v1022 = vpow.pop %v1021
    %v1023 = vmul.f32 %v775, 1.442695
    %v1024 = vpow.pop %v1023
    %v1025 = vmul.f32 %v776, 1.442695
    %v1026 = vpow.pop %v1025
    %v1027 = vmul.f32 %v777, 1.442695
    %v1028 = vpow.pop %v1027
    %v1029 = vmul.f32 %v778, 1.442695
    %v1030 = vpow.pop %v1029
    %v1031 = vmul.f32 %v779, 1.442695
    %v1032 = vpow.pop %v1031
    %v1033 = vmul.f32 %v780, 1.442695
    %v1034 = vpow.pop %v1033
    %v1035 = vmul.f32 %v781, 1.442695
    %v1036 = vpow.pop %v1035
    %v1037 = vmul.f32 %v782, 1.442695
    %v1038 = vpow.pop %v1037
    %v1039 = vmul.f32 %v783, 1.442695
    %v1040 = vpow.pop %v1039
    %v1041 = vmul.f32 %v784, 1.442695
    %v1042 = vpow.pop %v1041
    %v1043 = vmul.f32 %v785, 1.442695
    %v1044 = vpow.pop %v1043
    %v1045 = vmul.f32 %v786, 1.442695
    %v1046 = vpow.pop %v1045
    %v1047 = vmul.f32 %v787, 1.442695
    %v1048 = vpow.pop %v1047
    %v1177 = vlaneseq
    %v1178 = vand.u32 %v1177, 127
    %v1179 = vperm.slane %v794, %v1178
    %v1180 = vadd.s32 %v1178, 4294967288
    %v1181 = vperm.slane %v796, %v1180
    %vm1182 = vcmask 130112
    %v1183 = vsel %vm1182, %v1181, %v1179
    %v1184 = vadd.s32 %v1178, 4294967280
    %v1185 = vperm.slane %v798, %v1184
    %vm1186 = vcmask 195712
    %v1187 = vsel %vm1186, %v1185, %v1183
    %v1188 = vadd.s32 %v1178, 4294967272
    %v1189 = vperm.slane %v800, %v1188
    %vm1190 = vcmask 261312
    %v1191 = vsel %vm1190, %v1189, %v1187
    %v1192 = vadd.s32 %v1178, 4294967264
    %v1193 = vperm.slane %v802, %v1192
    %vm1194 = vcmask 326912
    %v1195 = vsel %vm1194, %v1193, %v1191
    %v1196 = vadd.s32 %v1178, 4294967256
    %v1197 = vperm.slane %v804, %v1196
    %vm1198 = vcmask 392512
    %v1199 = vsel %vm1198, %v1197, %v1195
    %v1200 = vadd.s32 %v1178, 4294967248
    %v1201 = vperm.slane %v806, %v1200
    %vm1202 = vcmask 458112
    %v1203 = vsel %vm1202, %v1201, %v1199
    %v1204 = vadd.s32 %v1178, 4294967240
    %v1205 = vperm.slane %v808, %v1204
    %vm1206 = vcmask 523712
    %v1207 = vsel %vm1206, %v1205, %v1203
    %v1208 = vadd.s32 %v1178, 4294967232
    %v1209 = vperm.slane %v810, %v1208
    %vm1210 = vcmask 589312
    %v1211 = vsel %vm1210, %v1209, %v1207
    %v1212 = vadd.s32 %v1178, 4294967224
    %v1213 = vperm.slane %v812, %v1212
    %vm1214 = vcmask 654912
    %v1215 = vsel %vm1214, %v1213, %v1211
    %v1216 = vadd.s32 %v1178, 4294967216
    %v1217 = vperm.slane %v814, %v1216
    %vm1218 = vcmask 720512
    %v1219 = vsel %vm1218, %v1217, %v1215
    %v1220 = vadd.s32 %v1178, 4294967208
    %v1221 = vperm.slane %v816, %v1220
    %vm1222 = vcmask 786112
    %v1223 = vsel %vm1222, %v1221, %v1219
    %v1224 = vadd.s32 %v1178, 4294967200
    %v1225 = vperm.slane %v818, %v1224
    %vm1226 = vcmask 851712
    %v1227 = vsel %vm1226, %v1225, %v1223
    %v1228 = vadd.s32 %v1178, 4294967192
    %v1229 = vperm.slane %v820, %v1228
    %vm1230 = vcmask 917312
    %v1231 = vsel %vm1230, %v1229, %v1227
    %v1232 = vadd.s32 %v1178, 4294967184
    %v1233 = vperm.slane %v822, %v1232
    %vm1234 = vcmask 982912
    %v1235 = vsel %vm1234, %v1233, %v1231
    %v1236 = vadd.s32 %v1178, 4294967176
    %v1237 = vperm.slane %v824, %v1236
    %vm1238 = vcmask 1048512
    %v1239 = vsel %vm1238, %v1237, %v1235
    %v1240 = vperm.slane %v826, %v1178
    %v1241 = vperm.slane %v828, %v1180
    %v1242 = vsel %vm1182, %v1241, %v1240
    %v1243 = vperm.slane %v830, %v1184
    %v1244 = vsel %vm1186, %v1243, %v1242
    %v1245 = vperm.slane %v832, %v1188
    %v1246 = vsel %vm1190, %v1245, %v1244
    %v1247 = vperm.slane %v834, %v1192
    %v1248 = vsel %vm1194, %v1247, %v1246
    %v1249 = vperm.slane %v836, %v1196
    %v1250 = vsel %vm1198, %v1249, %v1248
    %v1251 = vperm.slane %v838, %v1200
    %v1252 = vsel %vm1202, %v1251, %v1250
    %v1253 = vperm.slane %v840, %v1204
    %v1254 = vsel %vm1206, %v1253, %v1252
    %v1255 = vperm.slane %v842, %v1208
    %v1256 = vsel %vm1210, %v1255, %v1254
    %v1257 = vperm.slane %v844, %v1212
    %v1258 = vsel %vm1214, %v1257, %v1256
    %v1259 = vperm.slane %v846, %v1216
    %v1260 = vsel %vm1218, %v1259, %v1258
    %v1261 = vperm.slane %v848, %v1220
    %v1262 = vsel %vm1222, %v1261, %v1260
    %v1263 = vperm.slane %v850, %v1224
    %v1264 = vsel %vm1226, %v1263, %v1262
    %v1265 = vperm.slane %v852, %v1228
    %v1266 = vsel %vm1230, %v1265, %v1264
    %v1267 = vperm.slane %v854, %v1232
    %v1268 = vsel %vm1234, %v1267, %v1266
    %v1269 = vperm.slane %v856, %v1236
    %v1270 = vsel %vm1238, %v1269, %v1268
    %v1271 = vperm.slane %v858, %v1178
    %v1272 = vperm.slane %v860, %v1180
    %v1273 = vsel %vm1182, %v1272, %v1271
    %v1274 = vperm.slane %v862, %v1184
    %v1275 = vsel %vm1186, %v1274, %v1273
    %v1276 = vperm.slane %v864, %v1188
    %v1277 = vsel %vm1190, %v1276, %v1275
    %v1278 = vperm.slane %v866, %v1192
    %v1279 = vsel %vm1194, %v1278, %v1277
    %v1280 = vperm.slane %v868, %v1196
    %v1281 = vsel %vm1198, %v1280, %v1279
    %v1282 = vperm.slane %v870, %v1200
    %v1283 = vsel %vm1202, %v1282, %v1281
    %v1284 = vperm.slane %v872, %v1204
    %v1285 = vsel %vm1206, %v1284, %v1283
    %v1286 = vperm.slane %v874, %v1208
    %v1287 = vsel %vm1210, %v1286, %v1285
    %v1288 = vperm.slane %v876, %v1212
    %v1289 = vsel %vm1214, %v1288, %v1287
    %v1290 = vperm.slane %v878, %v1216
    %v1291 = vsel %vm1218, %v1290, %v1289
    %v1292 = vperm.slane %v880, %v1220
    %v1293 = vsel %vm1222, %v1292, %v1291
    %v1294 = vperm.slane %v882, %v1224
    %v1295 = vsel %vm1226, %v1294, %v1293
    %v1296 = vperm.slane %v884, %v1228
    %v1297 = vsel %vm1230, %v1296, %v1295
    %v1298 = vperm.slane %v886, %v1232
    %v1299 = vsel %vm1234, %v1298, %v1297
    %v1300 = vperm.slane %v888, %v1236
    %v1301 = vsel %vm1238, %v1300, %v1299
    %v1302 = vperm.slane %v890, %v1178
    %v1303 = vperm.slane %v892, %v1180
    %v1304 = vsel %vm1182, %v1303, %v1302
    %v1305 = vperm.slane %v894, %v1184
    %v1306 = vsel %vm1186, %v1305, %v1304
    %v1307 = vperm.slane %v896, %v1188
    %v1308 = vsel %vm1190, %v1307, %v1306
    %v1309 = vperm.slane %v898, %v1192
    %v1310 = vsel %vm1194, %v1309, %v1308
    %v1311 = vperm.slane %v900, %v1196
    %v1312 = vsel %vm1198, %v1311, %v1310
    %v1313 = vperm.slane %v902, %v1200
    %v1314 = vsel %vm1202, %v1313, %v1312
    %v1315 = vperm.slane %v904, %v1204
    %v1316 = vsel %vm1206, %v1315, %v1314
    %v1317 = vperm.slane %v906, %v1208
    %v1318 = vsel %vm1210, %v1317, %v1316
    %v1319 = vperm.slane %v908, %v1212
    %v1320 = vsel %vm1214, %v1319, %v1318
    %v1321 = vperm.slane %v910, %v1216
    %v1322 = vsel %vm1218, %v1321, %v1320
    %v1323 = vperm.slane %v912, %v1220
    %v1324 = vsel %vm1222, %v1323, %v1322
    %v1325 = vperm.slane %v914, %v1224
    %v1326 = vsel %vm1226, %v1325, %v1324
    %v1327 = vperm.slane %v916, %v1228
    %v1328 = vsel %vm1230, %v1327, %v1326
    %v1329 = vperm.slane %v918, %v1232
    %v1330 = vsel %vm1234, %v1329, %v1328
    %v1331 = vperm.slane %v920, %v1236
    %v1332 = vsel %vm1238, %v1331, %v1330
    %v1333 = vperm.slane %v922, %v1178
    %v1334 = vperm.slane %v924, %v1180
    %v1335 = vsel %vm1182, %v1334, %v1333
    %v1336 = vperm.slane %v926, %v1184
    %v1337 = vsel %vm1186, %v1336, %v1335
    %v1338 = vperm.slane %v928, %v1188
    %v1339 = vsel %vm1190, %v1338, %v1337
    %v1340 = vperm.slane %v930, %v1192
    %v1341 = vsel %vm1194, %v1340, %v1339
    %v1342 = vperm.slane %v932, %v1196
    %v1343 = vsel %vm1198, %v1342, %v1341
    %v1344 = vperm.slane %v934, %v1200
    %v1345 = vsel %vm1202, %v1344, %v1343
    %v1346 = vperm.slane %v936, %v1204
    %v1347 = vsel %vm1206, %v1346, %v1345
    %v1348 = vperm.slane %v938, %v1208
    %v1349 = vsel %vm1210, %v1348, %v1347
    %v1350 = vperm.slane %v940, %v1212
    %v1351 = vsel %vm1214, %v1350, %v1349
    %v1352 = vperm.slane %v942, %v1216
    %v1353 = vsel %vm1218, %v1352, %v1351
    %v1354 = vperm.slane %v944, %v1220
    %v1355 = vsel %vm1222, %v1354, %v1353
    %v1356 = vperm.slane %v946, %v1224
    %v1357 = vsel %vm1226, %v1356, %v1355
    %v1358 = vperm.slane %v948, %v1228
    %v1359 = vsel %vm1230, %v1358, %v1357
    %v1360 = vperm.slane %v950, %v1232
    %v1361 = vsel %vm1234, %v1360, %v1359
    %v1362 = vperm.slane %v952, %v1236
    %v1363 = vsel %vm1238, %v1362, %v1361
    %v1364 = vperm.slane %v954, %v1178
    %v1365 = vperm.slane %v956, %v1180
    %v1366 = vsel %vm1182, %v1365, %v1364
    %v1367 = vperm.slane %v958, %v1184
    %v1368 = vsel %vm1186, %v1367, %v1366
    %v1369 = vperm.slane %v960, %v1188
    %v1370 = vsel %vm1190, %v1369, %v1368
    %v1371 = vperm.slane %v962, %v1192
    %v1372 = vsel %vm1194, %v1371, %v1370
    %v1373 = vperm.slane %v964, %v1196
    %v1374 = vsel %vm1198, %v1373, %v1372
    %v1375 = vperm.slane %v966, %v1200
    %v1376 = vsel %vm1202, %v1375, %v1374
    %v1377 = vperm.slane %v968, %v1204
    %v1378 = vsel %vm1206, %v1377, %v1376
    %v1379 = vperm.slane %v970, %v1208
    %v1380 = vsel %vm1210, %v1379, %v1378
    %v1381 = vperm.slane %v972, %v1212
    %v1382 = vsel %vm1214, %v1381, %v1380
    %v1383 = vperm.slane %v974, %v1216
    %v1384 = vsel %vm1218, %v1383, %v1382
    %v1385 = vperm.slane %v976, %v1220
    %v1386 = vsel %vm1222, %v1385, %v1384
    %v1387 = vperm.slane %v978, %v1224
    %v1388 = vsel %vm1226, %v1387, %v1386
    %v1389 = vperm.slane %v980, %v1228
    %v1390 = vsel %vm1230, %v1389, %v1388
    %v1391 = vperm.slane %v982, %v1232
    %v1392 = vsel %vm1234, %v1391, %v1390
    %v1393 = vperm.slane %v984, %v1236
    %v1394 = vsel %vm1238, %v1393, %v1392
    %v1395 = vperm.slane %v986, %v1178
    %v1396 = vperm.slane %v988, %v1180
    %v1397 = vsel %vm1182, %v1396, %v1395
    %v1398 = vperm.slane %v990, %v1184
    %v1399 = vsel %vm1186, %v1398, %v1397
    %v1400 = vperm.slane %v992, %v1188
    %v1401 = vsel %vm1190, %v1400, %v1399
    %v1402 = vperm.slane %v994, %v1192
    %v1403 = vsel %vm1194, %v1402, %v1401
    %v1404 = vperm.slane %v996, %v1196
    %v1405 = vsel %vm1198, %v1404, %v1403
    %v1406 = vperm.slane %v998, %v1200
    %v1407 = vsel %vm1202, %v1406, %v1405
    %v1408 = vperm.slane %v1000, %v1204
    %v1409 = vsel %vm1206, %v1408, %v1407
    %v1410 = vperm.slane %v1002, %v1208
    %v1411 = vsel %vm1210, %v1410, %v1409
    %v1412 = vperm.slane %v1004, %v1212
    %v1413 = vsel %vm1214, %v1412, %v1411
    %v1414 = vperm.slane %v1006, %v1216
    %v1415 = vsel %vm1218, %v1414, %v1413
    %v1416 = vperm.slane %v1008, %v1220
    %v1417 = vsel %vm1222, %v1416, %v1415
    %v1418 = vperm.slane %v1010, %v1224
    %v1419 = vsel %vm1226, %v1418, %v1417
    %v1420 = vperm.slane %v1012, %v1228
    %v1421 = vsel %vm1230, %v1420, %v1419
    %v1422 = vperm.slane %v1014, %v1232
    %v1423 = vsel %vm1234, %v1422, %v1421
    %v1424 = vperm.slane %v1016, %v1236
    %v1425 = vsel %vm1238, %v1424, %v1423
    %v1426 = vperm.slane %v1018, %v1178
    %v1427 = vperm.slane %v1020, %v1180
    %v1428 = vsel %vm1182, %v1427, %v1426
    %v1429 = vperm.slane %v1022, %v1184
    %v1430 = vsel %vm1186, %v1429, %v1428
    %v1431 = vperm.slane %v1024, %v1188
    %v1432 = vsel %vm1190, %v1431, %v1430
    %v1433 = vperm.slane %v1026, %v1192
    %v1434 = vsel %vm1194, %v1433, %v1432
    %v1435 = vperm.slane %v1028, %v1196
    %v1436 = vsel %vm1198, %v1435, %v1434
    %v1437 = vperm.slane %v1030, %v1200
    %v1438 = vsel %vm1202, %v1437, %v1436
    %v1439 = vperm.slane %v1032, %v1204
    %v1440 = vsel %vm1206, %v1439, %v1438
    %v1441 = vperm.slane %v1034, %v1208
    %v1442 = vsel %vm1210, %v1441, %v1440
    %v1443 = vperm.slane %v1036, %v1212
    %v1444 = vsel %vm1214, %v1443, %v1442
    %v1445 = vperm.slane %v1038, %v1216
    %v1446 = vsel %vm1218, %v1445, %v1444
    %v1447 = vperm.slane %v1040, %v1220
    %v1448 = vsel %vm1222, %v1447, %v1446
    %v1449 = vperm.slane %v1042, %v1224
    %v1450 = vsel %vm1226, %v1449, %v1448
    %v1451 = vperm.slane %v1044, %v1228
    %v1452 = vsel %vm1230, %v1451, %v1450
    %v1453 = vperm.slane %v1046, %v1232
    %v1454 = vsel %vm1234, %v1453, %v1452
    %v1455 = vperm.slane %v1048, %v1236
    %v1456 = vsel %vm1238, %v1455, %v1454
    %vm1457 = vcmask 1041409
    %v1458 = vsel %vm1457, %v1270, %v1239
    %vm1459 = vcmask 1042434
    %v1460 = vsel %vm1459, %v1301, %v1458
    %vm1461 = vcmask 1043459
    %v1462 = vsel %vm1461, %v1332, %v1460
    %vm1463 = vcmask 1044484
    %v1464 = vsel %vm1463, %v1363, %v1462
    %vm1465 = vcmask 1045509
    %v1466 = vsel %vm1465, %v1394, %v1464
    %vm1467 = vcmask 1046534
    %v1468 = vsel %vm1467, %v1425, %v1466
    %vm1469 = vcmask 1047559
    %v1470 = vsel %vm1469, %v1456, %v1468
    %v1472 = vsel %vm792, %v1470, 0.0
    %v1473 = vrot.slane %v1472, 4
    %v1474 = vadd.f32 %v1472, %v1473
    %v1475 = vrot.slane %v1474, 2
    %v1476 = vadd.f32 %v1474, %v1475
    %v1477 = vrot.slane %v1476, 1
    %v1478 = vadd.f32 %v1476, %v1477
    %v1479 = vadd.f32 %v1478, 0.0001
    %v1480 = vrcp.pop %v1479
    %v1481 = vmul.f32 %v1479, %v1480
    %v1482 = vsub.f32 1.0, %v1481
    %v1483 = vmul.f32 %v1480, %v1482
    %v1484 = vadd.f32 %v1480, %v1483
    %vm1485 = vweird.f32 %v1479
    %vm1486 = vweird.f32 %v1480
    %vm1487 = vmor %vm1485, %vm1486
    %v1488 = vsel %vm1487, %v1480, %v1484
    %v1489 = vand.u32 2147483647, %v1479
    %vm1490 = vcmp.eq.f32.partialorder %v1489, 8.507059e+37
    %v1491 = vand.u32 %v1479, 2147483648
    %v1492 = vor.u32 1.1754944e-38, %v1491
    %v1493 = vsel %vm1490, %v1492, %v1488
    %v1494 = vmul.f32 %v1472, %v1493
    %1495 = vst [vmem:[#allocation2] sm:$0xff] %v1494
    // Predicated region
    $region14: #{tpu_custom_call.1} parent=1 // pred_check
      _
    $region15: #{tpu_custom_call.1} parent=1 // pred_check_branch
      %1497 = sbr.rel (0) target = $region17
    $region16: #{tpu_custom_call.1} parent=1 // pred_region
      %1499 = vsyncadd [#allocation3], 0
      %s1501 = sshll.u32 [#allocation2], 4
      %s1502 = int_to_ptr.vmem [resolvable:$true] %s1501
      %s1503 = sshll.u32 %s3, 4
      %s1504 = int_to_ptr.hbm [resolvable:$true] %s1503
      %1506 = dma.vmem_to_hbm [thread:$0]  %s1502, 128, %s1504, [#allocation3]
    $region17: #{tpu_custom_call.1} parent=1 // pred_fallthru
      _
    // Predicated region
    $region18: #{tpu_custom_call.1} parent=1 // pred_check
      _
    $region19: #{tpu_custom_call.1} parent=1 // pred_check_branch
      %1508 = sbr.rel (0) target = $region21
    $region20: #{tpu_custom_call.1} parent=1 // pred_region
      %1510 = dma.done [#allocation3], 128
    $region21: #{tpu_custom_call.1} parent=1 // pred_fallthru
      _
    %1511 = vsyncpa [#allocation3], 1

</llo_original>
